<compile_context>
chip_gen: v5e
topology: v5e:2x2
jax: 0.10.0
libtpu: 0.0.40
codegen_flags: <defaults>
</compile_context>

<pallas_src>
import functools

import jax
import jax.numpy as jnp
from jax.experimental import pallas as pl
from jax.experimental.pallas import tpu as pltpu


def mlp_kernel(x_ref,
               w1_ref, b1_ref, w2_ref, b2_ref, w3_ref, b3_ref,
               w4_ref, b4_ref, w5_ref, b5_ref, w6_ref, b6_ref,
               o_ref):
    # x_ref: [in_dim, batch_tile] f32, batch on lanes.
    h = x_ref[...]

    def dense(h, w_ref, b_ref, relu):
        # MXU in bf16, accumulate f32; bias-add / ReLU on the VPU in f32.
        y = jnp.dot(w_ref[...], h.astype(jnp.bfloat16),
                    preferred_element_type=jnp.float32) + b_ref[...]
        return jnp.maximum(y, 0.0) if relu else y

    h = dense(h, w1_ref, b1_ref, True)
    h = dense(h, w2_ref, b2_ref, True)
    h = dense(h, w3_ref, b3_ref, True)
    h = dense(h, w4_ref, b4_ref, True)
    h = dense(h, w5_ref, b5_ref, True)
    o_ref[...] = dense(h, w6_ref, b6_ref, False).astype(o_ref.dtype)


def mlp_forward(x, params, *, batch_tile=256):
    """x: [B, input_dim] f32; params: list of (W[out,in] f32, b[out,1] f32)."""
    B, in_dim = x.shape
    out_dim = params[-1][0].shape[0]

    # Pad batch to a multiple of batch_tile (lane axis => multiple of 128).
    assert batch_tile % 128 == 0, "batch_tile must be a multiple of 128"
    num_tiles = pl.cdiv(B, batch_tile)
    b_pad = num_tiles * batch_tile

    # Activations: features on sublanes, batch on lanes.
    xt = x.T                                   # [in_dim, B]
    if b_pad != B:
        xt = jnp.pad(xt, ((0, 0), (0, b_pad - B)))

    flat_args = []
    in_specs = [pl.BlockSpec((in_dim, batch_tile), lambda i: (0, i))]
    for w, b in params:
        flat_args.append(w.astype(jnp.bfloat16))        # MXU operand in bf16
        in_specs.append(pl.BlockSpec(w.shape, lambda i: (0, 0)))
        flat_args.append(b.astype(jnp.float32))          # bias stays f32
        in_specs.append(pl.BlockSpec(b.shape, lambda i: (0, 0)))

    out_spec = pl.BlockSpec((out_dim, batch_tile), lambda i: (0, i))

    out_t = pl.pallas_call(
        mlp_kernel,
        out_shape=jax.ShapeDtypeStruct((out_dim, b_pad), jnp.float32),
        grid_spec=pl.GridSpec(
            grid=(num_tiles,),
            in_specs=in_specs,
            out_specs=out_spec,
        ),
        compiler_params=pltpu.CompilerParams(
            dimension_semantics=("parallel",)),
    )(xt, *flat_args)

    return out_t[:, :B].T                       # back to [B, out_dim]


def init_params(key, input_dim, output_dim):
    """PyTorch nn.Linear default init: uniform(+/- 1/sqrt(fan_in)).

    Weights stored as [out_features, in_features]; biases as [out_features, 1].
    """
    dims = [input_dim, 32, 64, 128, 64, 32, output_dim]
    params = []
    for i in range(len(dims) - 1):
        fan_in, fan_out = dims[i], dims[i + 1]
        key, kw, kb = jax.random.split(key, 3)
        bound = 1.0 / jnp.sqrt(jnp.float32(fan_in))
        w = jax.random.uniform(kw, (fan_out, fan_in), jnp.float32, -bound, bound)
        b = jax.random.uniform(kb, (fan_out, 1), jnp.float32, -bound, bound)
        params.append((w, b))
    return params


def reference_forward_f32(x, params):
    """Pure-f32 reference (matches the PyTorch module semantics)."""
    h = x.T
    for i, (w, b) in enumerate(params):
        h = w @ h + b
        if i < len(params) - 1:
            h = jnp.maximum(h, 0.0)
    return h.T


def reference_forward_bf16(x, params):
    """Reference using the same bf16-MXU / f32-accumulate recipe as the kernel."""
    h = x.T
    for i, (w, b) in enumerate(params):
        h = jnp.dot(w.astype(jnp.bfloat16), h.astype(jnp.bfloat16),
                    preferred_element_type=jnp.float32) + b
        if i < len(params) - 1:
            h = jnp.maximum(h, 0.0)
    return h.T


if __name__ == "__main__":
    key = jax.random.PRNGKey(0)
    input_dim = 12      # kaggle bike-sharing feature count
    output_dim = 1
    batch = 1000        # not a multiple of the tile -> exercises padding path

    kx, kp = jax.random.split(key)
    x = jax.random.normal(kx, (batch, input_dim), dtype=jnp.float32)
    params = init_params(kp, input_dim, output_dim)

    fwd = jax.jit(functools.partial(mlp_forward, batch_tile=256))
    out = jax.block_until_ready(fwd(x, params))
    assert out.shape == (batch, output_dim)

    # Primary check: match the bf16-matmul / f32-accumulate reference tightly.
    ref_bf16 = reference_forward_bf16(x, params)
    assert jnp.allclose(out, ref_bf16, atol=1e-3, rtol=1e-3), \
        "mismatch vs bf16-matched reference"

    # Sanity check: close to the full-f32 PyTorch-equivalent forward.
    ref_f32 = reference_forward_f32(x, params)
    assert jnp.allclose(out, ref_f32, atol=3e-2, rtol=3e-2), \
        "mismatch vs f32 reference"

    print("KERNEL_OK")
</pallas_src>

<mosaic_0001>
module attributes {stable_mosaic.version = 11 : i64} {
  func.func @mlp_kernel(%arg0: i32, %arg1: memref<12x256xf32, #tpu.memory_space<vmem>>, %arg2: memref<32x12xbf16, #tpu.memory_space<vmem>>, %arg3: memref<32x1xf32, #tpu.memory_space<vmem>>, %arg4: memref<64x32xbf16, #tpu.memory_space<vmem>>, %arg5: memref<64x1xf32, #tpu.memory_space<vmem>>, %arg6: memref<128x64xbf16, #tpu.memory_space<vmem>>, %arg7: memref<128x1xf32, #tpu.memory_space<vmem>>, %arg8: memref<64x128xbf16, #tpu.memory_space<vmem>>, %arg9: memref<64x1xf32, #tpu.memory_space<vmem>>, %arg10: memref<32x64xbf16, #tpu.memory_space<vmem>>, %arg11: memref<32x1xf32, #tpu.memory_space<vmem>>, %arg12: memref<1x32xbf16, #tpu.memory_space<vmem>>, %arg13: memref<1x1xf32, #tpu.memory_space<vmem>>, %arg14: memref<1x256xf32, #tpu.memory_space<vmem>>) attributes {dimension_semantics = [#tpu.dimension_semantics<parallel>], iteration_bounds = array<i64: 4>, scalar_prefetch = 0 : i64, scratch_operands = 0 : i64, tpu.core_type = #tpu.core_type<tc>, window_params = [{transform_indices = @transform_0, window_bounds = array<i64: 12, 256>}, {pipeline_mode = #tpu.pipeline_mode<synchronous>, transform_indices = @transform_1, window_bounds = array<i64: 32, 12>}, {pipeline_mode = #tpu.pipeline_mode<synchronous>, transform_indices = @transform_2, window_bounds = array<i64: 32, 1>}, {pipeline_mode = #tpu.pipeline_mode<synchronous>, transform_indices = @transform_3, window_bounds = array<i64: 64, 32>}, {pipeline_mode = #tpu.pipeline_mode<synchronous>, transform_indices = @transform_4, window_bounds = array<i64: 64, 1>}, {pipeline_mode = #tpu.pipeline_mode<synchronous>, transform_indices = @transform_5, window_bounds = array<i64: 128, 64>}, {pipeline_mode = #tpu.pipeline_mode<synchronous>, transform_indices = @transform_6, window_bounds = array<i64: 128, 1>}, {pipeline_mode = #tpu.pipeline_mode<synchronous>, transform_indices = @transform_7, window_bounds = array<i64: 64, 128>}, {pipeline_mode = #tpu.pipeline_mode<synchronous>, transform_indices = @transform_8, window_bounds = array<i64: 64, 1>}, {pipeline_mode = #tpu.pipeline_mode<synchronous>, transform_indices = @transform_9, window_bounds = array<i64: 32, 64>}, {pipeline_mode = #tpu.pipeline_mode<synchronous>, transform_indices = @transform_10, window_bounds = array<i64: 32, 1>}, {pipeline_mode = #tpu.pipeline_mode<synchronous>, transform_indices = @transform_11, window_bounds = array<i64: 1, 32>}, {pipeline_mode = #tpu.pipeline_mode<synchronous>, transform_indices = @transform_12, window_bounds = array<i64: 1, 1>}, {transform_indices = @transform_13, window_bounds = array<i64: 1, 256>}]} {
    %c0 = arith.constant 0 : index
    %c0_0 = arith.constant 0 : index
    %0 = vector.load %arg1[%c0, %c0_0] : memref<12x256xf32, #tpu.memory_space<vmem>>, vector<12x256xf32>
    %c0_1 = arith.constant 0 : index
    %c0_2 = arith.constant 0 : index
    %1 = vector.load %arg2[%c0_1, %c0_2] : memref<32x12xbf16, #tpu.memory_space<vmem>>, vector<32x12xbf16>
    %2 = arith.truncf %0 : vector<12x256xf32> to vector<12x256xbf16>
    %cst = arith.constant dense<0.000000e+00> : vector<32x256xf32>
    %3 = tpu.matmul %1, %2, %cst {dimension_numbers = #tpu.dot_dimension_numbers<[1], [0], [0], [1], [0, 0, 1, 1], [], []>} : vector<32x12xbf16>, vector<12x256xbf16>, vector<32x256xf32> -> vector<32x256xf32>
    %c0_3 = arith.constant 0 : index
    %c0_4 = arith.constant 0 : index
    %4 = vector.load %arg3[%c0_3, %c0_4] : memref<32x1xf32, #tpu.memory_space<vmem>>, vector<32x1xf32>
    %5 = vector.broadcast %4 : vector<32x1xf32> to vector<32x256xf32>
    %6 = arith.addf %3, %5 : vector<32x256xf32>
    %cst_5 = arith.constant 0.000000e+00 : f32
    %7 = vector.broadcast %cst_5 : f32 to vector<32x256xf32>
    %8 = arith.maximumf %6, %7 : vector<32x256xf32>
    %c0_6 = arith.constant 0 : index
    %c0_7 = arith.constant 0 : index
    %9 = vector.load %arg4[%c0_6, %c0_7] : memref<64x32xbf16, #tpu.memory_space<vmem>>, vector<64x32xbf16>
    %10 = arith.truncf %8 : vector<32x256xf32> to vector<32x256xbf16>
    %cst_8 = arith.constant dense<0.000000e+00> : vector<64x256xf32>
    %11 = tpu.matmul %9, %10, %cst_8 {dimension_numbers = #tpu.dot_dimension_numbers<[1], [0], [0], [1], [0, 0, 1, 1], [], []>} : vector<64x32xbf16>, vector<32x256xbf16>, vector<64x256xf32> -> vector<64x256xf32>
    %c0_9 = arith.constant 0 : index
    %c0_10 = arith.constant 0 : index
    %12 = vector.load %arg5[%c0_9, %c0_10] : memref<64x1xf32, #tpu.memory_space<vmem>>, vector<64x1xf32>
    %13 = vector.broadcast %12 : vector<64x1xf32> to vector<64x256xf32>
    %14 = arith.addf %11, %13 : vector<64x256xf32>
    %cst_11 = arith.constant 0.000000e+00 : f32
    %15 = vector.broadcast %cst_11 : f32 to vector<64x256xf32>
    %16 = arith.maximumf %14, %15 : vector<64x256xf32>
    %c0_12 = arith.constant 0 : index
    %c0_13 = arith.constant 0 : index
    %17 = vector.load %arg6[%c0_12, %c0_13] : memref<128x64xbf16, #tpu.memory_space<vmem>>, vector<128x64xbf16>
    %18 = arith.truncf %16 : vector<64x256xf32> to vector<64x256xbf16>
    %cst_14 = arith.constant dense<0.000000e+00> : vector<128x256xf32>
    %19 = tpu.matmul %17, %18, %cst_14 {dimension_numbers = #tpu.dot_dimension_numbers<[1], [0], [0], [1], [0, 0, 1, 1], [], []>} : vector<128x64xbf16>, vector<64x256xbf16>, vector<128x256xf32> -> vector<128x256xf32>
    %c0_15 = arith.constant 0 : index
    %c0_16 = arith.constant 0 : index
    %20 = vector.load %arg7[%c0_15, %c0_16] : memref<128x1xf32, #tpu.memory_space<vmem>>, vector<128x1xf32>
    %21 = vector.broadcast %20 : vector<128x1xf32> to vector<128x256xf32>
    %22 = arith.addf %19, %21 : vector<128x256xf32>
    %cst_17 = arith.constant 0.000000e+00 : f32
    %23 = vector.broadcast %cst_17 : f32 to vector<128x256xf32>
    %24 = arith.maximumf %22, %23 : vector<128x256xf32>
    %c0_18 = arith.constant 0 : index
    %c0_19 = arith.constant 0 : index
    %25 = vector.load %arg8[%c0_18, %c0_19] : memref<64x128xbf16, #tpu.memory_space<vmem>>, vector<64x128xbf16>
    %26 = arith.truncf %24 : vector<128x256xf32> to vector<128x256xbf16>
    %cst_20 = arith.constant dense<0.000000e+00> : vector<64x256xf32>
    %27 = tpu.matmul %25, %26, %cst_20 {dimension_numbers = #tpu.dot_dimension_numbers<[1], [0], [0], [1], [0, 0, 1, 1], [], []>} : vector<64x128xbf16>, vector<128x256xbf16>, vector<64x256xf32> -> vector<64x256xf32>
    %c0_21 = arith.constant 0 : index
    %c0_22 = arith.constant 0 : index
    %28 = vector.load %arg9[%c0_21, %c0_22] : memref<64x1xf32, #tpu.memory_space<vmem>>, vector<64x1xf32>
    %29 = vector.broadcast %28 : vector<64x1xf32> to vector<64x256xf32>
    %30 = arith.addf %27, %29 : vector<64x256xf32>
    %cst_23 = arith.constant 0.000000e+00 : f32
    %31 = vector.broadcast %cst_23 : f32 to vector<64x256xf32>
    %32 = arith.maximumf %30, %31 : vector<64x256xf32>
    %c0_24 = arith.constant 0 : index
    %c0_25 = arith.constant 0 : index
    %33 = vector.load %arg10[%c0_24, %c0_25] : memref<32x64xbf16, #tpu.memory_space<vmem>>, vector<32x64xbf16>
    %34 = arith.truncf %32 : vector<64x256xf32> to vector<64x256xbf16>
    %cst_26 = arith.constant dense<0.000000e+00> : vector<32x256xf32>
    %35 = tpu.matmul %33, %34, %cst_26 {dimension_numbers = #tpu.dot_dimension_numbers<[1], [0], [0], [1], [0, 0, 1, 1], [], []>} : vector<32x64xbf16>, vector<64x256xbf16>, vector<32x256xf32> -> vector<32x256xf32>
    %c0_27 = arith.constant 0 : index
    %c0_28 = arith.constant 0 : index
    %36 = vector.load %arg11[%c0_27, %c0_28] : memref<32x1xf32, #tpu.memory_space<vmem>>, vector<32x1xf32>
    %37 = vector.broadcast %36 : vector<32x1xf32> to vector<32x256xf32>
    %38 = arith.addf %35, %37 : vector<32x256xf32>
    %cst_29 = arith.constant 0.000000e+00 : f32
    %39 = vector.broadcast %cst_29 : f32 to vector<32x256xf32>
    %40 = arith.maximumf %38, %39 : vector<32x256xf32>
    %c0_30 = arith.constant 0 : index
    %c0_31 = arith.constant 0 : index
    %41 = vector.load %arg12[%c0_30, %c0_31] : memref<1x32xbf16, #tpu.memory_space<vmem>>, vector<1x32xbf16>
    %42 = arith.truncf %40 : vector<32x256xf32> to vector<32x256xbf16>
    %cst_32 = arith.constant dense<0.000000e+00> : vector<1x256xf32>
    %43 = tpu.matmul %41, %42, %cst_32 {dimension_numbers = #tpu.dot_dimension_numbers<[1], [0], [0], [1], [0, 0, 1, 1], [], []>} : vector<1x32xbf16>, vector<32x256xbf16>, vector<1x256xf32> -> vector<1x256xf32>
    %c0_33 = arith.constant 0 : index
    %c0_34 = arith.constant 0 : index
    %44 = vector.load %arg13[%c0_33, %c0_34] : memref<1x1xf32, #tpu.memory_space<vmem>>, vector<1x1xf32>
    %45 = vector.broadcast %44 : vector<1x1xf32> to vector<1x256xf32>
    %46 = arith.addf %43, %45 : vector<1x256xf32>
    %c0_35 = arith.constant 0 : index
    %c0_36 = arith.constant 0 : index
    %47 = vector.load %arg14[%c0_35, %c0_36] : memref<1x256xf32, #tpu.memory_space<vmem>>, vector<1x256xf32>
    tpu.vector_store %arg14[%c0_35, %c0_36], %46 {strides = array<i32>} : memref<1x256xf32, #tpu.memory_space<vmem>>, vector<1x256xf32>,
    return
  }
  func.func @transform_0(%arg0: i32) -> (i32, i32) {
    %c0_i32 = arith.constant 0 : i32
    %c0_i32_0 = arith.constant 0 : i32
    return %c0_i32, %arg0 : i32, i32
  }
  func.func @transform_1(%arg0: i32) -> (i32, i32) {
    %c0_i32 = arith.constant 0 : i32
    %c0_i32_0 = arith.constant 0 : i32
    %c0_i32_1 = arith.constant 0 : i32
    return %c0_i32, %c0_i32_0 : i32, i32
  }
  func.func @transform_2(%arg0: i32) -> (i32, i32) {
    %c0_i32 = arith.constant 0 : i32
    %c0_i32_0 = arith.constant 0 : i32
    %c0_i32_1 = arith.constant 0 : i32
    return %c0_i32, %c0_i32_0 : i32, i32
  }
  func.func @transform_3(%arg0: i32) -> (i32, i32) {
    %c0_i32 = arith.constant 0 : i32
    %c0_i32_0 = arith.constant 0 : i32
    %c0_i32_1 = arith.constant 0 : i32
    return %c0_i32, %c0_i32_0 : i32, i32
  }
  func.func @transform_4(%arg0: i32) -> (i32, i32) {
    %c0_i32 = arith.constant 0 : i32
    %c0_i32_0 = arith.constant 0 : i32
    %c0_i32_1 = arith.constant 0 : i32
    return %c0_i32, %c0_i32_0 : i32, i32
  }
  func.func @transform_5(%arg0: i32) -> (i32, i32) {
    %c0_i32 = arith.constant 0 : i32
    %c0_i32_0 = arith.constant 0 : i32
    %c0_i32_1 = arith.constant 0 : i32
    return %c0_i32, %c0_i32_0 : i32, i32
  }
  func.func @transform_6(%arg0: i32) -> (i32, i32) {
    %c0_i32 = arith.constant 0 : i32
    %c0_i32_0 = arith.constant 0 : i32
    %c0_i32_1 = arith.constant 0 : i32
    return %c0_i32, %c0_i32_0 : i32, i32
  }
  func.func @transform_7(%arg0: i32) -> (i32, i32) {
    %c0_i32 = arith.constant 0 : i32
    %c0_i32_0 = arith.constant 0 : i32
    %c0_i32_1 = arith.constant 0 : i32
    return %c0_i32, %c0_i32_0 : i32, i32
  }
  func.func @transform_8(%arg0: i32) -> (i32, i32) {
    %c0_i32 = arith.constant 0 : i32
    %c0_i32_0 = arith.constant 0 : i32
    %c0_i32_1 = arith.constant 0 : i32
    return %c0_i32, %c0_i32_0 : i32, i32
  }
  func.func @transform_9(%arg0: i32) -> (i32, i32) {
    %c0_i32 = arith.constant 0 : i32
    %c0_i32_0 = arith.constant 0 : i32
    %c0_i32_1 = arith.constant 0 : i32
    return %c0_i32, %c0_i32_0 : i32, i32
  }
  func.func @transform_10(%arg0: i32) -> (i32, i32) {
    %c0_i32 = arith.constant 0 : i32
    %c0_i32_0 = arith.constant 0 : i32
    %c0_i32_1 = arith.constant 0 : i32
    return %c0_i32, %c0_i32_0 : i32, i32
  }
  func.func @transform_11(%arg0: i32) -> (i32, i32) {
    %c0_i32 = arith.constant 0 : i32
    %c0_i32_0 = arith.constant 0 : i32
    %c0_i32_1 = arith.constant 0 : i32
    return %c0_i32, %c0_i32_0 : i32, i32
  }
  func.func @transform_12(%arg0: i32) -> (i32, i32) {
    %c0_i32 = arith.constant 0 : i32
    %c0_i32_0 = arith.constant 0 : i32
    %c0_i32_1 = arith.constant 0 : i32
    return %c0_i32, %c0_i32_0 : i32, i32
  }
  func.func @transform_13(%arg0: i32) -> (i32, i32) {
    %c0_i32 = arith.constant 0 : i32
    %c0_i32_0 = arith.constant 0 : i32
    return %c0_i32, %arg0 : i32, i32
  }
}

</mosaic_0001>

<llo_original>
// kernel: mlp_forward.1
$region0: #{mlp_forward.1}
  #allocation0 [shape = 'u32[]', space=smem, size = 0x4, offset = 0x4, fixed_abs, tag = 'smem constant byte address 0x4 - core index']
  #allocation1 [shape = 'u32[72,128]{1,0:T(1,128)}', space=vmem, size = 0x9000, scoped, tag = 'internal scratch']
  #allocation2 [shape = 'f32[1,1]{1,0:T(1,128)S(1)}', space=vmem, size = 0x200, scoped, tag = 'scoped memory for mlp_forward.1']
  %s0 = inlined_call_operand.vmem [shape: f32[12,1024], index: 0, kind: input, shape index: {}]
  %s1 = inlined_call_operand.vmem [shape: bf16[32,12], index: 1, kind: input, shape index: {}]
  %s2 = inlined_call_operand.vmem [shape: f32[32,1], index: 2, kind: input, shape index: {}]
  %s3 = inlined_call_operand.vmem [shape: bf16[64,32], index: 3, kind: input, shape index: {}]
  %s4 = inlined_call_operand.vmem [shape: f32[64,1], index: 4, kind: input, shape index: {}]
  %s5 = inlined_call_operand.vmem [shape: bf16[128,64], index: 5, kind: input, shape index: {}]
  %s6 = inlined_call_operand.vmem [shape: f32[128,1], index: 6, kind: input, shape index: {}]
  %s7 = inlined_call_operand.vmem [shape: bf16[64,128], index: 7, kind: input, shape index: {}]
  %s8 = inlined_call_operand.vmem [shape: f32[64,1], index: 8, kind: input, shape index: {}]
  %s9 = inlined_call_operand.vmem [shape: bf16[32,64], index: 9, kind: input, shape index: {}]
  %s10 = inlined_call_operand.vmem [shape: f32[32,1], index: 10, kind: input, shape index: {}]
  %s11 = inlined_call_operand.vmem [shape: bf16[1,32], index: 11, kind: input, shape index: {}]
  %s12 = inlined_call_operand.<no memory space> [shape: f32[1,1], index: 12, kind: input, shape index: {}]
  %s13 = inlined_call_operand.vmem [shape: f32[1,1024], index: 13, kind: output, shape index: {}]
  %s14 = sld [smem:[#allocation0]]
  $region108: #{mlp_forward.1} parent=0
    _
  %s16 = ssub.s32 1, %s14
  %s17 = scalar_select 0, %s16, %s14
  %v18 = vstv %s12
  %19 = vst [vmem:[#allocation2] sm:$0x1] %v18
  $region1: #{mlp_forward.1} parent=0
    #allocation3 [shape = 'u8[32768]{0}', space=vmem, size = 0x8000, scoped, tag = 'input window, operand 0']
    loop: start=0, step=1, limit=6
    $region2: #{mlp_forward.1} parent=1 // loop_pre_header
      _
    $region3: #{mlp_forward.1} parent=1 // loop_header
      %s21 = sphi 0, %s25
      %p22 = scmp.ge.s32.totalorder %s21, 6
      %s31 = sphi 0, %s33
      %s34 = sphi 0, %s31
      %s35 = sphi 0, %s34
      %s51 = sphi 0, %s35
      %s55 = sphi 0, %s55
      %s57 = sphi 0, %s55
      %s58 = sphi 0, %s57
      %s72 = sphi 0, %s58
      %s76 = sphi 0, %s76
      %s78 = sphi 0, %s76
      %s79 = sphi 0, %s78
      %s93 = sphi 0, %s79
      %s97 = sphi 0, %s97
      %s99 = sphi 0, %s97
      %s100 = sphi 0, %s99
      %s114 = sphi 0, %s100
      %s118 = sphi 0, %s118
      %s120 = sphi 0, %s118
      %s121 = sphi 0, %s120
      %s135 = sphi 0, %s121
      %s139 = sphi 0, %s139
      %s141 = sphi 0, %s139
      %s142 = sphi 0, %s141
      %s156 = sphi 0, %s142
      %s160 = sphi 0, %s160
      %s162 = sphi 0, %s160
      %s163 = sphi 0, %s162
      %s177 = sphi 0, %s163
      %s181 = sphi 0, %s181
      %s183 = sphi 0, %s181
      %s184 = sphi 0, %s183
      %s198 = sphi 0, %s184
      %s202 = sphi 0, %s202
      %s204 = sphi 0, %s202
      %s205 = sphi 0, %s204
      %s219 = sphi 0, %s205
      %s223 = sphi 0, %s223
      %s225 = sphi 0, %s223
      %s226 = sphi 0, %s225
      %s240 = sphi 0, %s226
      %s244 = sphi 0, %s244
      %s246 = sphi 0, %s244
      %s247 = sphi 0, %s246
      %s261 = sphi 0, %s247
      %s265 = sphi 0, %s265
      %s267 = sphi 0, %s265
      %s268 = sphi 0, %s267
      %s282 = sphi 0, %s268
      %s286 = sphi 0, %s286
      %s288 = sphi 0, %s286
      %s289 = sphi 0, %s288
      %s303 = sphi 0, %s289
      %s309 = sphi 0, %s311
      %s312 = sphi 0, %s309
      %s313 = sphi 0, %s312
      %s329 = sphi 0, %s313
    $region4: #{mlp_forward.1} parent=1 // loop_header_branch
      %24 = sbr.rel (%p22) target = $region8
    $region5: #{mlp_forward.1} parent=1 // loop_body
      %s26 = ssub.s32 %s21, 1
      %s27 = ssub.s32 %s21, 2
      %s28 = sadd.s32 %s21, 1
      %s29 = ssub.s32 %s21, %s28
      %p30 = scmp.eq.s32.totalorder %s29, 0
      %s32 = sadd.s32 %s31, 1
      %s33 = scalar_select %p30, %s31, %s32
      %p36 = pneg %p30
      %p37 = scmp.eq.s32.totalorder %s21, 3
      %p38 = por %p36, %p37
      %p39 = scmp.ne.s32.totalorder %s31, %s34
      %p40 = scmp.eq.s32.totalorder %s21, 0
      %p41 = por %p39, %p40
      %p42 = scmp.ne.s32.totalorder %s31, %s34
      %p43 = scmp.eq.s32.totalorder %s26, 3
      %p44 = por %p42, %p43
      %p45 = scmp.ne.s32.totalorder %s34, %s35
      %p46 = scmp.eq.s32.totalorder %s26, 0
      %p47 = por %p45, %p46
      %p48 = scmp.ne.s32.totalorder %s34, %s35
      %p49 = scmp.eq.s32.totalorder %s27, 3
      %p50 = por %p48, %p49
      %p52 = scmp.ne.s32.totalorder %s35, %s51
      %p53 = scmp.eq.s32.totalorder %s27, 0
      %p54 = por %p52, %p53
      %s56 = sadd.s32 %s55, 1
      %p59 = scmp.eq.s32.totalorder %s21, 3
      %p60 = scmp.ne.s32.totalorder %s55, %s57
      %p61 = scmp.eq.s32.totalorder %s21, 0
      %p62 = por %p60, %p61
      %p63 = scmp.ne.s32.totalorder %s55, %s57
      %p64 = scmp.eq.s32.totalorder %s26, 3
      %p65 = por %p63, %p64
      %p66 = scmp.ne.s32.totalorder %s57, %s58
      %p67 = scmp.eq.s32.totalorder %s26, 0
      %p68 = por %p66, %p67
      %p69 = scmp.ne.s32.totalorder %s57, %s58
      %p70 = scmp.eq.s32.totalorder %s27, 3
      %p71 = por %p69, %p70
      %p73 = scmp.ne.s32.totalorder %s58, %s72
      %p74 = scmp.eq.s32.totalorder %s27, 0
      %p75 = por %p73, %p74
      %s77 = sadd.s32 %s76, 1
      %p80 = scmp.eq.s32.totalorder %s21, 3
      %p81 = scmp.ne.s32.totalorder %s76, %s78
      %p82 = scmp.eq.s32.totalorder %s21, 0
      %p83 = por %p81, %p82
      %p84 = scmp.ne.s32.totalorder %s76, %s78
      %p85 = scmp.eq.s32.totalorder %s26, 3
      %p86 = por %p84, %p85
      %p87 = scmp.ne.s32.totalorder %s78, %s79
      %p88 = scmp.eq.s32.totalorder %s26, 0
      %p89 = por %p87, %p88
      %p90 = scmp.ne.s32.totalorder %s78, %s79
      %p91 = scmp.eq.s32.totalorder %s27, 3
      %p92 = por %p90, %p91
      %p94 = scmp.ne.s32.totalorder %s79, %s93
      %p95 = scmp.eq.s32.totalorder %s27, 0
      %p96 = por %p94, %p95
      %s98 = sadd.s32 %s97, 1
      %p101 = scmp.eq.s32.totalorder %s21, 3
      %p102 = scmp.ne.s32.totalorder %s97, %s99
      %p103 = scmp.eq.s32.totalorder %s21, 0
      %p104 = por %p102, %p103
      %p105 = scmp.ne.s32.totalorder %s97, %s99
      %p106 = scmp.eq.s32.totalorder %s26, 3
      %p107 = por %p105, %p106
      %p108 = scmp.ne.s32.totalorder %s99, %s100
      %p109 = scmp.eq.s32.totalorder %s26, 0
      %p110 = por %p108, %p109
      %p111 = scmp.ne.s32.totalorder %s99, %s100
      %p112 = scmp.eq.s32.totalorder %s27, 3
      %p113 = por %p111, %p112
      %p115 = scmp.ne.s32.totalorder %s100, %s114
      %p116 = scmp.eq.s32.totalorder %s27, 0
      %p117 = por %p115, %p116
      %s119 = sadd.s32 %s118, 1
      %p122 = scmp.eq.s32.totalorder %s21, 3
      %p123 = scmp.ne.s32.totalorder %s118, %s120
      %p124 = scmp.eq.s32.totalorder %s21, 0
      %p125 = por %p123, %p124
      %p126 = scmp.ne.s32.totalorder %s118, %s120
      %p127 = scmp.eq.s32.totalorder %s26, 3
      %p128 = por %p126, %p127
      %p129 = scmp.ne.s32.totalorder %s120, %s121
      %p130 = scmp.eq.s32.totalorder %s26, 0
      %p131 = por %p129, %p130
      %p132 = scmp.ne.s32.totalorder %s120, %s121
      %p133 = scmp.eq.s32.totalorder %s27, 3
      %p134 = por %p132, %p133
      %p136 = scmp.ne.s32.totalorder %s121, %s135
      %p137 = scmp.eq.s32.totalorder %s27, 0
      %p138 = por %p136, %p137
      %s140 = sadd.s32 %s139, 1
      %p143 = scmp.eq.s32.totalorder %s21, 3
      %p144 = scmp.ne.s32.totalorder %s139, %s141
      %p145 = scmp.eq.s32.totalorder %s21, 0
      %p146 = por %p144, %p145
      %p147 = scmp.ne.s32.totalorder %s139, %s141
      %p148 = scmp.eq.s32.totalorder %s26, 3
      %p149 = por %p147, %p148
      %p150 = scmp.ne.s32.totalorder %s141, %s142
      %p151 = scmp.eq.s32.totalorder %s26, 0
      %p152 = por %p150, %p151
      %p153 = scmp.ne.s32.totalorder %s141, %s142
      %p154 = scmp.eq.s32.totalorder %s27, 3
      %p155 = por %p153, %p154
      %p157 = scmp.ne.s32.totalorder %s142, %s156
      %p158 = scmp.eq.s32.totalorder %s27, 0
      %p159 = por %p157, %p158
      %s161 = sadd.s32 %s160, 1
      %p164 = scmp.eq.s32.totalorder %s21, 3
      %p165 = scmp.ne.s32.totalorder %s160, %s162
      %p166 = scmp.eq.s32.totalorder %s21, 0
      %p167 = por %p165, %p166
      %p168 = scmp.ne.s32.totalorder %s160, %s162
      %p169 = scmp.eq.s32.totalorder %s26, 3
      %p170 = por %p168, %p169
      %p171 = scmp.ne.s32.totalorder %s162, %s163
      %p172 = scmp.eq.s32.totalorder %s26, 0
      %p173 = por %p171, %p172
      %p174 = scmp.ne.s32.totalorder %s162, %s163
      %p175 = scmp.eq.s32.totalorder %s27, 3
      %p176 = por %p174, %p175
      %p178 = scmp.ne.s32.totalorder %s163, %s177
      %p179 = scmp.eq.s32.totalorder %s27, 0
      %p180 = por %p178, %p179
      %s182 = sadd.s32 %s181, 1
      %p185 = scmp.eq.s32.totalorder %s21, 3
      %p186 = scmp.ne.s32.totalorder %s181, %s183
      %p187 = scmp.eq.s32.totalorder %s21, 0
      %p188 = por %p186, %p187
      %p189 = scmp.ne.s32.totalorder %s181, %s183
      %p190 = scmp.eq.s32.totalorder %s26, 3
      %p191 = por %p189, %p190
      %p192 = scmp.ne.s32.totalorder %s183, %s184
      %p193 = scmp.eq.s32.totalorder %s26, 0
      %p194 = por %p192, %p193
      %p195 = scmp.ne.s32.totalorder %s183, %s184
      %p196 = scmp.eq.s32.totalorder %s27, 3
      %p197 = por %p195, %p196
      %p199 = scmp.ne.s32.totalorder %s184, %s198
      %p200 = scmp.eq.s32.totalorder %s27, 0
      %p201 = por %p199, %p200
      %s203 = sadd.s32 %s202, 1
      %p206 = scmp.eq.s32.totalorder %s21, 3
      %p207 = scmp.ne.s32.totalorder %s202, %s204
      %p208 = scmp.eq.s32.totalorder %s21, 0
      %p209 = por %p207, %p208
      %p210 = scmp.ne.s32.totalorder %s202, %s204
      %p211 = scmp.eq.s32.totalorder %s26, 3
      %p212 = por %p210, %p211
      %p213 = scmp.ne.s32.totalorder %s204, %s205
      %p214 = scmp.eq.s32.totalorder %s26, 0
      %p215 = por %p213, %p214
      %p216 = scmp.ne.s32.totalorder %s204, %s205
      %p217 = scmp.eq.s32.totalorder %s27, 3
      %p218 = por %p216, %p217
      %p220 = scmp.ne.s32.totalorder %s205, %s219
      %p221 = scmp.eq.s32.totalorder %s27, 0
      %p222 = por %p220, %p221
      %s224 = sadd.s32 %s223, 1
      %p227 = scmp.eq.s32.totalorder %s21, 3
      %p228 = scmp.ne.s32.totalorder %s223, %s225
      %p229 = scmp.eq.s32.totalorder %s21, 0
      %p230 = por %p228, %p229
      %p231 = scmp.ne.s32.totalorder %s223, %s225
      %p232 = scmp.eq.s32.totalorder %s26, 3
      %p233 = por %p231, %p232
      %p234 = scmp.ne.s32.totalorder %s225, %s226
      %p235 = scmp.eq.s32.totalorder %s26, 0
      %p236 = por %p234, %p235
      %p237 = scmp.ne.s32.totalorder %s225, %s226
      %p238 = scmp.eq.s32.totalorder %s27, 3
      %p239 = por %p237, %p238
      %p241 = scmp.ne.s32.totalorder %s226, %s240
      %p242 = scmp.eq.s32.totalorder %s27, 0
      %p243 = por %p241, %p242
      %s245 = sadd.s32 %s244, 1
      %p248 = scmp.eq.s32.totalorder %s21, 3
      %p249 = scmp.ne.s32.totalorder %s244, %s246
      %p250 = scmp.eq.s32.totalorder %s21, 0
      %p251 = por %p249, %p250
      %p252 = scmp.ne.s32.totalorder %s244, %s246
      %p253 = scmp.eq.s32.totalorder %s26, 3
      %p254 = por %p252, %p253
      %p255 = scmp.ne.s32.totalorder %s246, %s247
      %p256 = scmp.eq.s32.totalorder %s26, 0
      %p257 = por %p255, %p256
      %p258 = scmp.ne.s32.totalorder %s246, %s247
      %p259 = scmp.eq.s32.totalorder %s27, 3
      %p260 = por %p258, %p259
      %p262 = scmp.ne.s32.totalorder %s247, %s261
      %p263 = scmp.eq.s32.totalorder %s27, 0
      %p264 = por %p262, %p263
      %s266 = sadd.s32 %s265, 1
      %p269 = scmp.eq.s32.totalorder %s21, 3
      %p270 = scmp.ne.s32.totalorder %s265, %s267
      %p271 = scmp.eq.s32.totalorder %s21, 0
      %p272 = por %p270, %p271
      %p273 = scmp.ne.s32.totalorder %s265, %s267
      %p274 = scmp.eq.s32.totalorder %s26, 3
      %p275 = por %p273, %p274
      %p276 = scmp.ne.s32.totalorder %s267, %s268
      %p277 = scmp.eq.s32.totalorder %s26, 0
      %p278 = por %p276, %p277
      %p279 = scmp.ne.s32.totalorder %s267, %s268
      %p280 = scmp.eq.s32.totalorder %s27, 3
      %p281 = por %p279, %p280
      %p283 = scmp.ne.s32.totalorder %s268, %s282
      %p284 = scmp.eq.s32.totalorder %s27, 0
      %p285 = por %p283, %p284
      %s287 = sadd.s32 %s286, 1
      %p290 = scmp.eq.s32.totalorder %s21, 3
      %p291 = scmp.ne.s32.totalorder %s286, %s288
      %p292 = scmp.eq.s32.totalorder %s21, 0
      %p293 = por %p291, %p292
      %p294 = scmp.ne.s32.totalorder %s286, %s288
      %p295 = scmp.eq.s32.totalorder %s26, 3
      %p296 = por %p294, %p295
      %p297 = scmp.ne.s32.totalorder %s288, %s289
      %p298 = scmp.eq.s32.totalorder %s26, 0
      %p299 = por %p297, %p298
      %p300 = scmp.ne.s32.totalorder %s288, %s289
      %p301 = scmp.eq.s32.totalorder %s27, 3
      %p302 = por %p300, %p301
      %p304 = scmp.ne.s32.totalorder %s289, %s303
      %p305 = scmp.eq.s32.totalorder %s27, 0
      %p306 = por %p304, %p305
      %s307 = ssub.s32 %s21, %s28
      %p308 = scmp.eq.s32.totalorder %s307, 0
      %s310 = sadd.s32 %s309, 1
      %s311 = scalar_select %p308, %s309, %s310
      %p314 = pneg %p308
      %p315 = scmp.eq.s32.totalorder %s21, 3
      %p316 = por %p314, %p315
      %p317 = scmp.ne.s32.totalorder %s309, %s312
      %p318 = scmp.eq.s32.totalorder %s21, 0
      %p319 = por %p317, %p318
      %p320 = scmp.ne.s32.totalorder %s309, %s312
      %p321 = scmp.eq.s32.totalorder %s26, 3
      %p322 = por %p320, %p321
      %p323 = scmp.ne.s32.totalorder %s312, %s313
      %p324 = scmp.eq.s32.totalorder %s26, 0
      %p325 = por %p323, %p324
      %p326 = scmp.ne.s32.totalorder %s312, %s313
      %p327 = scmp.eq.s32.totalorder %s27, 3
      %p328 = por %p326, %p327
      %p330 = scmp.ne.s32.totalorder %s313, %s329
      %p331 = scmp.eq.s32.totalorder %s27, 0
      %p332 = por %p330, %p331
      %p333 = scmp.le.s32.totalorder 1, %s21
      %p334 = scmp.lt.s32.totalorder %s21, 5
      %p335 = pnand %p333, %p334
      %p336 = pneg %p335
      // Predicated region
      $region9: #{mlp_forward.1} parent=5 // pred_check
        _
      $region10: #{mlp_forward.1} parent=5 // pred_check_branch
        %338 = sbr.rel (%p335) target = $region12
      $region11: #{mlp_forward.1} parent=5 // pred_region
        %s339 = ssub.s32 %s21, 1
        // Predicated region
        $region13: #{mlp_forward.1} parent=11 // pred_check
          %p340 = pneg %p68
        $region14: #{mlp_forward.1} parent=11 // pred_check_branch
          %342 = sbr.rel (%p340) target = $region16
        $region15: #{mlp_forward.1} parent=11 // pred_region
          _
        $region16: #{mlp_forward.1} parent=11 // pred_fallthru
          _
        // Predicated region
        $region17: #{mlp_forward.1} parent=11 // pred_check
          %p343 = pneg %p89
        $region18: #{mlp_forward.1} parent=11 // pred_check_branch
          %345 = sbr.rel (%p343) target = $region20
        $region19: #{mlp_forward.1} parent=11 // pred_region
          _
        $region20: #{mlp_forward.1} parent=11 // pred_fallthru
          _
        // Predicated region
        $region21: #{mlp_forward.1} parent=11 // pred_check
          %p346 = pneg %p110
        $region22: #{mlp_forward.1} parent=11 // pred_check_branch
          %348 = sbr.rel (%p346) target = $region24
        $region23: #{mlp_forward.1} parent=11 // pred_region
          _
        $region24: #{mlp_forward.1} parent=11 // pred_fallthru
          _
        // Predicated region
        $region25: #{mlp_forward.1} parent=11 // pred_check
          %p349 = pneg %p131
        $region26: #{mlp_forward.1} parent=11 // pred_check_branch
          %351 = sbr.rel (%p349) target = $region28
        $region27: #{mlp_forward.1} parent=11 // pred_region
          _
        $region28: #{mlp_forward.1} parent=11 // pred_fallthru
          _
        // Predicated region
        $region29: #{mlp_forward.1} parent=11 // pred_check
          %p352 = pneg %p152
        $region30: #{mlp_forward.1} parent=11 // pred_check_branch
          %354 = sbr.rel (%p352) target = $region32
        $region31: #{mlp_forward.1} parent=11 // pred_region
          _
        $region32: #{mlp_forward.1} parent=11 // pred_fallthru
          _
        // Predicated region
        $region33: #{mlp_forward.1} parent=11 // pred_check
          %p355 = pneg %p173
        $region34: #{mlp_forward.1} parent=11 // pred_check_branch
          %357 = sbr.rel (%p355) target = $region36
        $region35: #{mlp_forward.1} parent=11 // pred_region
          _
        $region36: #{mlp_forward.1} parent=11 // pred_fallthru
          _
        // Predicated region
        $region37: #{mlp_forward.1} parent=11 // pred_check
          %p358 = pneg %p194
        $region38: #{mlp_forward.1} parent=11 // pred_check_branch
          %360 = sbr.rel (%p358) target = $region40
        $region39: #{mlp_forward.1} parent=11 // pred_region
          _
        $region40: #{mlp_forward.1} parent=11 // pred_fallthru
          _
        // Predicated region
        $region41: #{mlp_forward.1} parent=11 // pred_check
          %p361 = pneg %p215
        $region42: #{mlp_forward.1} parent=11 // pred_check_branch
          %363 = sbr.rel (%p361) target = $region44
        $region43: #{mlp_forward.1} parent=11 // pred_region
          _
        $region44: #{mlp_forward.1} parent=11 // pred_fallthru
          _
        // Predicated region
        $region45: #{mlp_forward.1} parent=11 // pred_check
          %p364 = pneg %p236
        $region46: #{mlp_forward.1} parent=11 // pred_check_branch
          %366 = sbr.rel (%p364) target = $region48
        $region47: #{mlp_forward.1} parent=11 // pred_region
          _
        $region48: #{mlp_forward.1} parent=11 // pred_fallthru
          _
        // Predicated region
        $region49: #{mlp_forward.1} parent=11 // pred_check
          %p367 = pneg %p257
        $region50: #{mlp_forward.1} parent=11 // pred_check_branch
          %369 = sbr.rel (%p367) target = $region52
        $region51: #{mlp_forward.1} parent=11 // pred_region
          _
        $region52: #{mlp_forward.1} parent=11 // pred_fallthru
          _
        // Predicated region
        $region53: #{mlp_forward.1} parent=11 // pred_check
          %p370 = pneg %p278
        $region54: #{mlp_forward.1} parent=11 // pred_check_branch
          %372 = sbr.rel (%p370) target = $region56
        $region55: #{mlp_forward.1} parent=11 // pred_region
          _
        $region56: #{mlp_forward.1} parent=11 // pred_fallthru
          _
        // Predicated region
        $region57: #{mlp_forward.1} parent=11 // pred_check
          %p373 = pneg %p299
        $region58: #{mlp_forward.1} parent=11 // pred_check_branch
          %375 = sbr.rel (%p373) target = $region60
        $region59: #{mlp_forward.1} parent=11 // pred_region
          _
        $region60: #{mlp_forward.1} parent=11 // pred_fallthru
          _
      $region12: #{mlp_forward.1} parent=5 // pred_fallthru
        _
      %p376 = scmp.lt.s32.totalorder %s21, 4
      // Predicated region
      $region61: #{mlp_forward.1} parent=5 // pred_check
        %p377 = pneg %p376
      $region62: #{mlp_forward.1} parent=5 // pred_check_branch
        %379 = sbr.rel (%p377) target = $region64
      $region63: #{mlp_forward.1} parent=5 // pred_region
        // Predicated region
        $region65: #{mlp_forward.1} parent=63 // pred_check
          %p380 = pneg %p41
        $region66: #{mlp_forward.1} parent=63 // pred_check_branch
          %382 = sbr.rel (%p380) target = $region68
        $region67: #{mlp_forward.1} parent=63 // pred_region
          %s383 = sand.u32 %s31, 1
          %s384 = sand.u32 %s31, 1
          %s385 = smul.addr %s384, 32
          %s386 = scalar_lea.vmem [#allocation3], %s385
          %s387 = smul.u32 2, %s21
          %s388 = smul.addr %s387, 8
          %s389 = scalar_lea.vmem %s0, %s388
          // Predicated region
          $region69: #{mlp_forward.1} parent=67 // pred_check
            _
          $region70: #{mlp_forward.1} parent=67 // pred_check_branch
            %391 = sbr.rel (0) target = $region72
          $region71: #{mlp_forward.1} parent=67 // pred_region
            // Predicated region
            $region73: #{mlp_forward.1} parent=71 // pred_check
              _
            $region74: #{mlp_forward.1} parent=71 // pred_check_branch
              %393 = sbr.rel (0) target = $region76
            $region75: #{mlp_forward.1} parent=71 // pred_region
              loop: start=0, step=1, limit=1
              $region77: #{mlp_forward.1} parent=75 // loop_pre_header
                _
              $region78: #{mlp_forward.1} parent=75 // loop_header
                %s395 = sphi 0, %s399
                %p396 = scmp.ge.s32.totalorder %s395, 1
                %s400 = sphi %s389, %s389
                %s401 = sphi %s386, %s386
              $region79: #{mlp_forward.1} parent=75 // loop_header_branch
                %398 = sbr.rel (%p396) target = $region83
              $region80: #{mlp_forward.1} parent=75 // loop_body
                %v402 = vld [vmem:[%s400] sm:$0xff]
                %403 = vst [vmem:[%s401] sm:$0xff] %v402
                %v404 = vld [vmem:[%s400 + $0x8] sm:$0xff]
                %405 = vst [vmem:[%s401 + $0x8] sm:$0xff] %v404
                %v406 = vld [vmem:[%s400 + $0x40] sm:$0xff]
                %407 = vst [vmem:[%s401 + $0x10] sm:$0xff] %v406
                %v408 = vld [vmem:[%s400 + $0x48] sm:$0xff]
                %409 = vst [vmem:[%s401 + $0x18] sm:$0xff] %v408
              $region81: #{mlp_forward.1} parent=75 // loop_footer
                %s399 = sadd.s32 1, %s395
              $region82: #{mlp_forward.1} parent=75 // loop_footer_branch
                %394 = sbr.rel target = $region78
              $region83: #{mlp_forward.1} parent=75 // loop_exit
                _
            $region76: #{mlp_forward.1} parent=71 // pred_fallthru
              _
            // Predicated region
            $region84: #{mlp_forward.1} parent=71 // pred_check
              _
            $region85: #{mlp_forward.1} parent=71 // pred_check_branch
              %411 = sbr.rel target = $region87
            $region86: #{mlp_forward.1} parent=71 // pred_region
              _
            $region87: #{mlp_forward.1} parent=71 // pred_fallthru
              _
          $region72: #{mlp_forward.1} parent=67 // pred_fallthru
            _
          %412 = vnop
        $region68: #{mlp_forward.1} parent=63 // pred_fallthru
          _
      $region64: #{mlp_forward.1} parent=5 // pred_fallthru
        _
      %p413 = scmp.le.s32.totalorder 1, %s21
      %p414 = scmp.lt.s32.totalorder %s21, 5
      %p415 = pnand %p413, %p414
      %p416 = pneg %p415
      // Predicated region
      $region88: #{mlp_forward.1} parent=5 // pred_check
        _
      $region89: #{mlp_forward.1} parent=5 // pred_check_branch
        %418 = sbr.rel (%p415) target = $region91
      $region90: #{mlp_forward.1} parent=5 // pred_region
        %s419 = ssub.s32 %s21, 1
        %s420 = sand.u32 %s34, 1
        %s421 = sand.u32 %s34, 1
        %s422 = smul.addr %s421, 32
        %s423 = scalar_lea.vmem [#allocation3], %s422
        // Predicated region
        $region92: #{mlp_forward.1} parent=90 // pred_check
          %p424 = pneg %p47
        $region93: #{mlp_forward.1} parent=90 // pred_check_branch
          %426 = sbr.rel (%p424) target = $region95
        $region94: #{mlp_forward.1} parent=90 // pred_region
          _
        $region95: #{mlp_forward.1} parent=90 // pred_fallthru
          _
        %s427 = sand.u32 %s34, 1
        %s428 = sand.u32 %s34, 1
        %s429 = smul.addr %s428, 32
        %s430 = scalar_lea.vmem [#allocation3], %s429
        %p431 = pneg %p47
        %p432 = pneg %p44
        %p433 = pneg %p68
        %p434 = pneg %p65
        %p435 = pneg %p89
        %p436 = pneg %p86
        %p437 = pneg %p110
        %p438 = pneg %p107
        %p439 = pneg %p131
        %p440 = pneg %p128
        %p441 = pneg %p152
        %p442 = pneg %p149
        %p443 = pneg %p173
        %p444 = pneg %p170
        %p445 = pneg %p194
        %p446 = pneg %p191
        %p447 = pneg %p215
        %p448 = pneg %p212
        %p449 = pneg %p236
        %p450 = pneg %p233
        %p451 = pneg %p257
        %p452 = pneg %p254
        %p453 = pneg %p278
        %p454 = pneg %p275
        %p455 = pneg %p299
        %p456 = pneg %p296
        %p457 = pneg %p325
        %p458 = pneg %p322
        %s459 = smul.u32 2, %s26
        %p460 = scmp.lt.s32.totalorder %s459, 7
        %s461 = scalar_select %p460, %s459, 7
        %s462 = scalar_lea.vmem %s13, %s461
        %s463 = smul.u32 2, %s26
        %s464 = smul.u32 2, %s26
        %p465 = scmp.lt.s32.totalorder %s464, 7
        %s466 = scalar_select %p465, %s464, 7
        %s467 = scalar_lea.vmem %s13, %s466
        %s468 = smul.u32 2, %s26
        %v470 = vld [vmem:[%s423] sm:$0xff]
        %v471 = vld [vmem:[%s423 + $0x8] sm:$0xff]
        %v472 = vld [vmem:[%s423 + $0x10] sm:$0xf]
        %v473 = vld [vmem:[%s423 + $0x18] sm:$0xf]
        %v474 = vld [vmem:[%s1] sm:$0xf]
        %v475 = vld [vmem:[%s1 + $0x4] sm:$0xf]
        %v476 = vld [vmem:[%s1 + $0x8] sm:$0xf]
        %v477 = vld [vmem:[%s1 + $0xc] sm:$0xf]
        %v478 = vpack.c.bf16 %v472, %v470
        %v479 = vpack.c.bf16 %v473, %v471
        %v480 = vld [vmem:[%s2] sm:$0xff]
        %v481 = vld [vmem:[%s2 + $0x8] sm:$0xff]
        %v482 = vld [vmem:[%s2 + $0x10] sm:$0xff]
        %v483 = vld [vmem:[%s2 + $0x18] sm:$0xff]
        %485 = vset.pattern.permute.xlu0 0
        %486 = vperm.xlu0 %485, %v480
        %v487 = vpop.permute.xlu0 %486
        %490 = vset.pattern.permute.xlu0 0
        %491 = vperm.xlu0 %490, %v481
        %v492 = vpop.permute.xlu0 %491
        %495 = vset.pattern.permute.xlu0 0
        %496 = vperm.xlu0 %495, %v482
        %v497 = vpop.permute.xlu0 %496
        %500 = vset.pattern.permute.xlu0 0
        %501 = vperm.xlu0 %500, %v483
        %v502 = vpop.permute.xlu0 %501
        %v508 = vunpack.c.l.b16 %v474
        %v509 = vunpack.c.l.b16 %v475
        %v510 = vunpack.c.l.b16 %v476
        %v511 = vunpack.c.l.b16 %v477
        %v512 = vpack.c.b16 %v509, %v508
        %v513 = vpack.c.b16 %v511, %v510
        %vm514 = vcmask 97280
        %v516 = vsel %vm514, %v512, 0
        %v519 = vsel %vm514, %v513, 0
        %vm521 = vcmask 1045504
        %v523 = vsel %vm521, %v478, 0
        %v526 = vsel %vm521, %v479, 0
        %528 = vmatpush.bf16.msra.mxu0 0
        %529 = vmatpush.bf16.msra.mxu0 0
        %530 = vmatpush.bf16.msra.mxu0 0
        %531 = vmatpush.bf16.msra.mxu0 0
        %532 = vmatpush.bf16.msra.mxu0 0
        %533 = vmatpush.bf16.msra.mxu0 0
        %534 = vmatpush.bf16.msra.mxu0 0
        %535 = vmatpush.bf16.msra.mxu0 %v523
        %536 = vmatmul.bf16.gmra.mxu0 %v516
        %v537 = vpop.f32.mrf.mxu0
        %v538 = vadd.f32 %v487, %v537
        %v539 = vpop.f32.mrf.mxu0
        %v540 = vadd.f32 %v492, %v539
        %541 = vmatmul.bf16.gmra.mxu0 %v519
        %v542 = vpop.f32.mrf.mxu0
        %v543 = vadd.f32 %v497, %v542
        %v544 = vpop.f32.mrf.mxu0
        %v545 = vadd.f32 %v502, %v544
        %546 = vdwg.mxu0
        %547 = vmatpush.bf16.msra.mxu0 0
        %548 = vmatpush.bf16.msra.mxu0 0
        %549 = vmatpush.bf16.msra.mxu0 0
        %550 = vmatpush.bf16.msra.mxu0 0
        %551 = vmatpush.bf16.msra.mxu0 0
        %552 = vmatpush.bf16.msra.mxu0 0
        %553 = vmatpush.bf16.msra.mxu0 0
        %554 = vmatpush.bf16.msra.mxu0 %v526
        %555 = vmatmul.bf16.gmra.mxu0 %v516
        %v556 = vpop.f32.mrf.mxu0
        %v557 = vadd.f32 %v487, %v556
        %v558 = vpop.f32.mrf.mxu0
        %v559 = vadd.f32 %v492, %v558
        %560 = vmatmul.bf16.gmra.mxu0 %v519
        %v561 = vpop.f32.mrf.mxu0
        %v562 = vadd.f32 %v497, %v561
        %v563 = vpop.f32.mrf.mxu0
        %v564 = vadd.f32 %v502, %v563
        %565 = vdwg.mxu0
        %v566 = vmax.f32 %v538, 0.0
        %v567 = vmax.f32 %v557, 0.0
        %v568 = vmax.f32 %v540, 0.0
        %v569 = vmax.f32 %v559, 0.0
        %v570 = vmax.f32 %v543, 0.0
        %v571 = vmax.f32 %v562, 0.0
        %v572 = vmax.f32 %v545, 0.0
        %v573 = vmax.f32 %v564, 0.0
        %v574 = vld [vmem:[%s3] sm:$0xf]
        %v575 = vld [vmem:[%s3 + $0x4] sm:$0xf]
        %v576 = vld [vmem:[%s3 + $0x8] sm:$0xf]
        %v577 = vld [vmem:[%s3 + $0xc] sm:$0xf]
        %v578 = vld [vmem:[%s3 + $0x10] sm:$0xf]
        %v579 = vld [vmem:[%s3 + $0x14] sm:$0xf]
        %v580 = vld [vmem:[%s3 + $0x18] sm:$0xf]
        %v581 = vld [vmem:[%s3 + $0x1c] sm:$0xf]
        %v582 = vpack.c.bf16 %v568, %v566
        %v583 = vpack.c.bf16 %v569, %v567
        %v584 = vpack.c.bf16 %v572, %v570
        %v585 = vpack.c.bf16 %v573, %v571
        %v586 = vld [vmem:[%s4] sm:$0xff]
        %v587 = vld [vmem:[%s4 + $0x8] sm:$0xff]
        %v588 = vld [vmem:[%s4 + $0x10] sm:$0xff]
        %v589 = vld [vmem:[%s4 + $0x18] sm:$0xff]
        %v590 = vld [vmem:[%s4 + $0x20] sm:$0xff]
        %v591 = vld [vmem:[%s4 + $0x28] sm:$0xff]
        %v592 = vld [vmem:[%s4 + $0x30] sm:$0xff]
        %v593 = vld [vmem:[%s4 + $0x38] sm:$0xff]
        %595 = vset.pattern.permute.xlu0 0
        %596 = vperm.xlu0 %595, %v586
        %v597 = vpop.permute.xlu0 %596
        %600 = vset.pattern.permute.xlu0 0
        %601 = vperm.xlu0 %600, %v587
        %v602 = vpop.permute.xlu0 %601
        %605 = vset.pattern.permute.xlu0 0
        %606 = vperm.xlu0 %605, %v588
        %v607 = vpop.permute.xlu0 %606
        %610 = vset.pattern.permute.xlu0 0
        %611 = vperm.xlu0 %610, %v589
        %v612 = vpop.permute.xlu0 %611
        %615 = vset.pattern.permute.xlu0 0
        %616 = vperm.xlu0 %615, %v590
        %v617 = vpop.permute.xlu0 %616
        %620 = vset.pattern.permute.xlu0 0
        %621 = vperm.xlu0 %620, %v591
        %v622 = vpop.permute.xlu0 %621
        %625 = vset.pattern.permute.xlu0 0
        %626 = vperm.xlu0 %625, %v592
        %v627 = vpop.permute.xlu0 %626
        %630 = vset.pattern.permute.xlu0 0
        %631 = vperm.xlu0 %630, %v593
        %v632 = vpop.permute.xlu0 %631
        %v642 = vunpack.c.l.b16 %v574
        %v643 = vunpack.c.l.b16 %v575
        %v644 = vunpack.c.l.b16 %v576
        %v645 = vunpack.c.l.b16 %v577
        %v646 = vunpack.c.l.b16 %v578
        %v647 = vunpack.c.l.b16 %v579
        %v648 = vunpack.c.l.b16 %v580
        %v649 = vunpack.c.l.b16 %v581
        %v650 = vpack.c.b16 %v643, %v642
        %v651 = vpack.c.b16 %v645, %v644
        %v652 = vpack.c.b16 %v647, %v646
        %v653 = vpack.c.b16 %v649, %v648
        %vm654 = vcmask 261120
        %v656 = vsel %vm654, %v650, 0
        %v659 = vsel %vm654, %v651, 0
        %v662 = vsel %vm654, %v652, 0
        %v665 = vsel %vm654, %v653, 0
        %667 = vmatpush.bf16.msra.mxu0 0
        %668 = vmatpush.bf16.msra.mxu0 0
        %669 = vmatpush.bf16.msra.mxu0 0
        %670 = vmatpush.bf16.msra.mxu0 0
        %671 = vmatpush.bf16.msra.mxu0 0
        %672 = vmatpush.bf16.msra.mxu0 0
        %673 = vmatpush.bf16.msra.mxu0 %v584
        %674 = vmatpush.bf16.msra.mxu0 %v582
        %675 = vmatmul.bf16.gmra.mxu0 %v656
        %v676 = vpop.f32.mrf.mxu0
        %v677 = vadd.f32 %v597, %v676
        %v678 = vpop.f32.mrf.mxu0
        %v679 = vadd.f32 %v602, %v678
        %680 = vmatmul.bf16.gmra.mxu0 %v659
        %v681 = vpop.f32.mrf.mxu0
        %v682 = vadd.f32 %v607, %v681
        %v683 = vpop.f32.mrf.mxu0
        %v684 = vadd.f32 %v612, %v683
        %685 = vmatmul.bf16.gmra.mxu0 %v662
        %v686 = vpop.f32.mrf.mxu0
        %v687 = vadd.f32 %v617, %v686
        %v688 = vpop.f32.mrf.mxu0
        %v689 = vadd.f32 %v622, %v688
        %690 = vmatmul.bf16.gmra.mxu0 %v665
        %v691 = vpop.f32.mrf.mxu0
        %v692 = vadd.f32 %v627, %v691
        %v693 = vpop.f32.mrf.mxu0
        %v694 = vadd.f32 %v632, %v693
        %695 = vdwg.mxu0
        %696 = vmatpush.bf16.msra.mxu0 0
        %697 = vmatpush.bf16.msra.mxu0 0
        %698 = vmatpush.bf16.msra.mxu0 0
        %699 = vmatpush.bf16.msra.mxu0 0
        %700 = vmatpush.bf16.msra.mxu0 0
        %701 = vmatpush.bf16.msra.mxu0 0
        %702 = vmatpush.bf16.msra.mxu0 %v585
        %703 = vmatpush.bf16.msra.mxu0 %v583
        %704 = vmatmul.bf16.gmra.mxu0 %v656
        %v705 = vpop.f32.mrf.mxu0
        %v706 = vadd.f32 %v597, %v705
        %v707 = vpop.f32.mrf.mxu0
        %v708 = vadd.f32 %v602, %v707
        %709 = vmatmul.bf16.gmra.mxu0 %v659
        %v710 = vpop.f32.mrf.mxu0
        %v711 = vadd.f32 %v607, %v710
        %v712 = vpop.f32.mrf.mxu0
        %v713 = vadd.f32 %v612, %v712
        %714 = vmatmul.bf16.gmra.mxu0 %v662
        %v715 = vpop.f32.mrf.mxu0
        %v716 = vadd.f32 %v617, %v715
        %v717 = vpop.f32.mrf.mxu0
        %v718 = vadd.f32 %v622, %v717
        %719 = vmatmul.bf16.gmra.mxu0 %v665
        %v720 = vpop.f32.mrf.mxu0
        %v721 = vadd.f32 %v627, %v720
        %v722 = vpop.f32.mrf.mxu0
        %v723 = vadd.f32 %v632, %v722
        %724 = vdwg.mxu0
        %v725 = vmax.f32 %v677, 0.0
        %v726 = vmax.f32 %v706, 0.0
        %v727 = vmax.f32 %v679, 0.0
        %v728 = vmax.f32 %v708, 0.0
        %v729 = vmax.f32 %v682, 0.0
        %v730 = vmax.f32 %v711, 0.0
        %v731 = vmax.f32 %v684, 0.0
        %v732 = vmax.f32 %v713, 0.0
        %v733 = vmax.f32 %v687, 0.0
        %v734 = vmax.f32 %v716, 0.0
        %v735 = vmax.f32 %v689, 0.0
        %v736 = vmax.f32 %v718, 0.0
        %v737 = vmax.f32 %v692, 0.0
        %v738 = vmax.f32 %v721, 0.0
        %v739 = vmax.f32 %v694, 0.0
        %v740 = vmax.f32 %v723, 0.0
        %v741 = vld [vmem:[%s5] sm:$0xf]
        %v742 = vld [vmem:[%s5 + $0x4] sm:$0xf]
        %v743 = vld [vmem:[%s5 + $0x8] sm:$0xf]
        %v744 = vld [vmem:[%s5 + $0xc] sm:$0xf]
        %v745 = vld [vmem:[%s5 + $0x10] sm:$0xf]
        %v746 = vld [vmem:[%s5 + $0x14] sm:$0xf]
        %v747 = vld [vmem:[%s5 + $0x18] sm:$0xf]
        %v748 = vld [vmem:[%s5 + $0x1c] sm:$0xf]
        %v749 = vld [vmem:[%s5 + $0x20] sm:$0xf]
        %v750 = vld [vmem:[%s5 + $0x24] sm:$0xf]
        %v751 = vld [vmem:[%s5 + $0x28] sm:$0xf]
        %v752 = vld [vmem:[%s5 + $0x2c] sm:$0xf]
        %v753 = vld [vmem:[%s5 + $0x30] sm:$0xf]
        %v754 = vld [vmem:[%s5 + $0x34] sm:$0xf]
        %v755 = vld [vmem:[%s5 + $0x38] sm:$0xf]
        %v756 = vld [vmem:[%s5 + $0x3c] sm:$0xf]
        %v757 = vpack.c.bf16 %v727, %v725
        %v758 = vpack.c.bf16 %v728, %v726
        %v759 = vpack.c.bf16 %v731, %v729
        %v760 = vpack.c.bf16 %v732, %v730
        %v761 = vpack.c.bf16 %v735, %v733
        %v762 = vpack.c.bf16 %v736, %v734
        %v763 = vpack.c.bf16 %v739, %v737
        %v764 = vpack.c.bf16 %v740, %v738
        %v765 = vld [vmem:[%s6] sm:$0xff]
        %v766 = vld [vmem:[%s6 + $0x8] sm:$0xff]
        %v767 = vld [vmem:[%s6 + $0x10] sm:$0xff]
        %v768 = vld [vmem:[%s6 + $0x18] sm:$0xff]
        %v769 = vld [vmem:[%s6 + $0x20] sm:$0xff]
        %v770 = vld [vmem:[%s6 + $0x28] sm:$0xff]
        %v771 = vld [vmem:[%s6 + $0x30] sm:$0xff]
        %v772 = vld [vmem:[%s6 + $0x38] sm:$0xff]
        %v773 = vld [vmem:[%s6 + $0x40] sm:$0xff]
        %v774 = vld [vmem:[%s6 + $0x48] sm:$0xff]
        %v775 = vld [vmem:[%s6 + $0x50] sm:$0xff]
        %v776 = vld [vmem:[%s6 + $0x58] sm:$0xff]
        %v777 = vld [vmem:[%s6 + $0x60] sm:$0xff]
        %v778 = vld [vmem:[%s6 + $0x68] sm:$0xff]
        %v779 = vld [vmem:[%s6 + $0x70] sm:$0xff]
        %v780 = vld [vmem:[%s6 + $0x78] sm:$0xff]
        %782 = vset.pattern.permute.xlu0 0
        %783 = vperm.xlu0 %782, %v765
        %v784 = vpop.permute.xlu0 %783
        %787 = vset.pattern.permute.xlu0 0
        %788 = vperm.xlu0 %787, %v766
        %v789 = vpop.permute.xlu0 %788
        %792 = vset.pattern.permute.xlu0 0
        %793 = vperm.xlu0 %792, %v767
        %v794 = vpop.permute.xlu0 %793
        %797 = vset.pattern.permute.xlu0 0
        %798 = vperm.xlu0 %797, %v768
        %v799 = vpop.permute.xlu0 %798
        %802 = vset.pattern.permute.xlu0 0
        %803 = vperm.xlu0 %802, %v769
        %v804 = vpop.permute.xlu0 %803
        %807 = vset.pattern.permute.xlu0 0
        %808 = vperm.xlu0 %807, %v770
        %v809 = vpop.permute.xlu0 %808
        %812 = vset.pattern.permute.xlu0 0
        %813 = vperm.xlu0 %812, %v771
        %v814 = vpop.permute.xlu0 %813
        %817 = vset.pattern.permute.xlu0 0
        %818 = vperm.xlu0 %817, %v772
        %v819 = vpop.permute.xlu0 %818
        %822 = vset.pattern.permute.xlu0 0
        %823 = vperm.xlu0 %822, %v773
        %v824 = vpop.permute.xlu0 %823
        %827 = vset.pattern.permute.xlu0 0
        %828 = vperm.xlu0 %827, %v774
        %v829 = vpop.permute.xlu0 %828
        %832 = vset.pattern.permute.xlu0 0
        %833 = vperm.xlu0 %832, %v775
        %v834 = vpop.permute.xlu0 %833
        %837 = vset.pattern.permute.xlu0 0
        %838 = vperm.xlu0 %837, %v776
        %v839 = vpop.permute.xlu0 %838
        %842 = vset.pattern.permute.xlu0 0
        %843 = vperm.xlu0 %842, %v777
        %v844 = vpop.permute.xlu0 %843
        %847 = vset.pattern.permute.xlu0 0
        %848 = vperm.xlu0 %847, %v778
        %v849 = vpop.permute.xlu0 %848
        %852 = vset.pattern.permute.xlu0 0
        %853 = vperm.xlu0 %852, %v779
        %v854 = vpop.permute.xlu0 %853
        %857 = vset.pattern.permute.xlu0 0
        %858 = vperm.xlu0 %857, %v780
        %v859 = vpop.permute.xlu0 %858
        %v877 = vunpack.c.l.b16 %v741
        %v878 = vunpack.c.l.b16 %v742
        %v879 = vunpack.c.l.b16 %v743
        %v880 = vunpack.c.l.b16 %v744
        %v881 = vunpack.c.l.b16 %v745
        %v882 = vunpack.c.l.b16 %v746
        %v883 = vunpack.c.l.b16 %v747
        %v884 = vunpack.c.l.b16 %v748
        %v885 = vunpack.c.l.b16 %v749
        %v886 = vunpack.c.l.b16 %v750
        %v887 = vunpack.c.l.b16 %v751
        %v888 = vunpack.c.l.b16 %v752
        %v889 = vunpack.c.l.b16 %v753
        %v890 = vunpack.c.l.b16 %v754
        %v891 = vunpack.c.l.b16 %v755
        %v892 = vunpack.c.l.b16 %v756
        %v893 = vpack.c.b16 %v878, %v877
        %v894 = vpack.c.b16 %v880, %v879
        %v895 = vpack.c.b16 %v882, %v881
        %v896 = vpack.c.b16 %v884, %v883
        %v897 = vpack.c.b16 %v886, %v885
        %v898 = vpack.c.b16 %v888, %v887
        %v899 = vpack.c.b16 %v890, %v889
        %v900 = vpack.c.b16 %v892, %v891
        %vm901 = vcmask 523264
        %v903 = vsel %vm901, %v893, 0
        %v906 = vsel %vm901, %v894, 0
        %v909 = vsel %vm901, %v895, 0
        %v912 = vsel %vm901, %v896, 0
        %v915 = vsel %vm901, %v897, 0
        %v918 = vsel %vm901, %v898, 0
        %v921 = vsel %vm901, %v899, 0
        %v924 = vsel %vm901, %v900, 0
        %926 = vmatpush.bf16.msra.mxu0 0
        %927 = vmatpush.bf16.msra.mxu0 0
        %928 = vmatpush.bf16.msra.mxu0 0
        %929 = vmatpush.bf16.msra.mxu0 0
        %930 = vmatpush.bf16.msra.mxu0 %v763
        %931 = vmatpush.bf16.msra.mxu0 %v761
        %932 = vmatpush.bf16.msra.mxu0 %v759
        %933 = vmatpush.bf16.msra.mxu0 %v757
        %934 = vmatmul.bf16.gmra.mxu0 %v903
        %v935 = vpop.f32.mrf.mxu0
        %v936 = vadd.f32 %v784, %v935
        %v937 = vpop.f32.mrf.mxu0
        %v938 = vadd.f32 %v789, %v937
        %939 = vmatmul.bf16.gmra.mxu0 %v906
        %v940 = vpop.f32.mrf.mxu0
        %v941 = vadd.f32 %v794, %v940
        %v942 = vpop.f32.mrf.mxu0
        %v943 = vadd.f32 %v799, %v942
        %944 = vmatmul.bf16.gmra.mxu0 %v909
        %v945 = vpop.f32.mrf.mxu0
        %v946 = vadd.f32 %v804, %v945
        %v947 = vpop.f32.mrf.mxu0
        %v948 = vadd.f32 %v809, %v947
        %949 = vmatmul.bf16.gmra.mxu0 %v912
        %v950 = vpop.f32.mrf.mxu0
        %v951 = vadd.f32 %v814, %v950
        %v952 = vpop.f32.mrf.mxu0
        %v953 = vadd.f32 %v819, %v952
        %954 = vmatmul.bf16.gmra.mxu0 %v915
        %v955 = vpop.f32.mrf.mxu0
        %v956 = vadd.f32 %v824, %v955
        %v957 = vpop.f32.mrf.mxu0
        %v958 = vadd.f32 %v829, %v957
        %959 = vmatmul.bf16.gmra.mxu0 %v918
        %v960 = vpop.f32.mrf.mxu0
        %v961 = vadd.f32 %v834, %v960
        %v962 = vpop.f32.mrf.mxu0
        %v963 = vadd.f32 %v839, %v962
        %964 = vmatmul.bf16.gmra.mxu0 %v921
        %v965 = vpop.f32.mrf.mxu0
        %v966 = vadd.f32 %v844, %v965
        %v967 = vpop.f32.mrf.mxu0
        %v968 = vadd.f32 %v849, %v967
        %969 = vmatmul.bf16.gmra.mxu0 %v924
        %v970 = vpop.f32.mrf.mxu0
        %v971 = vadd.f32 %v854, %v970
        %v972 = vpop.f32.mrf.mxu0
        %v973 = vadd.f32 %v859, %v972
        %974 = vdwg.mxu0
        %975 = vmatpush.bf16.msra.mxu0 0
        %976 = vmatpush.bf16.msra.mxu0 0
        %977 = vmatpush.bf16.msra.mxu0 0
        %978 = vmatpush.bf16.msra.mxu0 0
        %979 = vmatpush.bf16.msra.mxu0 %v764
        %980 = vmatpush.bf16.msra.mxu0 %v762
        %981 = vmatpush.bf16.msra.mxu0 %v760
        %982 = vmatpush.bf16.msra.mxu0 %v758
        %983 = vmatmul.bf16.gmra.mxu0 %v903
        %v984 = vpop.f32.mrf.mxu0
        %v985 = vadd.f32 %v784, %v984
        %v986 = vpop.f32.mrf.mxu0
        %v987 = vadd.f32 %v789, %v986
        %988 = vmatmul.bf16.gmra.mxu0 %v906
        %v989 = vpop.f32.mrf.mxu0
        %v990 = vadd.f32 %v794, %v989
        %v991 = vpop.f32.mrf.mxu0
        %v992 = vadd.f32 %v799, %v991
        %993 = vmatmul.bf16.gmra.mxu0 %v909
        %v994 = vpop.f32.mrf.mxu0
        %v995 = vadd.f32 %v804, %v994
        %v996 = vpop.f32.mrf.mxu0
        %v997 = vadd.f32 %v809, %v996
        %998 = vmatmul.bf16.gmra.mxu0 %v912
        %v999 = vpop.f32.mrf.mxu0
        %v1000 = vadd.f32 %v814, %v999
        %v1001 = vpop.f32.mrf.mxu0
        %v1002 = vadd.f32 %v819, %v1001
        %1003 = vmatmul.bf16.gmra.mxu0 %v915
        %v1004 = vpop.f32.mrf.mxu0
        %v1005 = vadd.f32 %v824, %v1004
        %v1006 = vpop.f32.mrf.mxu0
        %v1007 = vadd.f32 %v829, %v1006
        %1008 = vmatmul.bf16.gmra.mxu0 %v918
        %v1009 = vpop.f32.mrf.mxu0
        %v1010 = vadd.f32 %v834, %v1009
        %v1011 = vpop.f32.mrf.mxu0
        %v1012 = vadd.f32 %v839, %v1011
        %1013 = vmatmul.bf16.gmra.mxu0 %v921
        %v1014 = vpop.f32.mrf.mxu0
        %v1015 = vadd.f32 %v844, %v1014
        %v1016 = vpop.f32.mrf.mxu0
        %v1017 = vadd.f32 %v849, %v1016
        %1018 = vmatmul.bf16.gmra.mxu0 %v924
        %v1019 = vpop.f32.mrf.mxu0
        %v1020 = vadd.f32 %v854, %v1019
        %v1021 = vpop.f32.mrf.mxu0
        %v1022 = vadd.f32 %v859, %v1021
        %1023 = vdwg.mxu0
        %v1024 = vmax.f32 %v936, 0.0
        %v1025 = vmax.f32 %v985, 0.0
        %v1026 = vmax.f32 %v938, 0.0
        %v1027 = vmax.f32 %v987, 0.0
        %v1028 = vmax.f32 %v941, 0.0
        %v1029 = vmax.f32 %v990, 0.0
        %v1030 = vmax.f32 %v943, 0.0
        %v1031 = vmax.f32 %v992, 0.0
        %v1032 = vmax.f32 %v946, 0.0
        %v1033 = vmax.f32 %v995, 0.0
        %v1034 = vmax.f32 %v948, 0.0
        %v1035 = vmax.f32 %v997, 0.0
        %v1036 = vmax.f32 %v951, 0.0
        %v1037 = vmax.f32 %v1000, 0.0
        %v1038 = vmax.f32 %v953, 0.0
        %v1039 = vmax.f32 %v1002, 0.0
        %v1040 = vmax.f32 %v956, 0.0
        %v1041 = vmax.f32 %v1005, 0.0
        %v1042 = vmax.f32 %v958, 0.0
        %v1043 = vmax.f32 %v1007, 0.0
        %v1044 = vmax.f32 %v961, 0.0
        %v1045 = vmax.f32 %v1010, 0.0
        %v1046 = vmax.f32 %v963, 0.0
        %v1047 = vmax.f32 %v1012, 0.0
        %v1048 = vmax.f32 %v966, 0.0
        %v1049 = vmax.f32 %v1015, 0.0
        %v1050 = vmax.f32 %v968, 0.0
        %v1051 = vmax.f32 %v1017, 0.0
        %v1052 = vmax.f32 %v971, 0.0
        %v1053 = vmax.f32 %v1020, 0.0
        %v1054 = vmax.f32 %v973, 0.0
        %v1055 = vmax.f32 %v1022, 0.0
        %v1056 = vld [vmem:[%s7] sm:$0xf]
        %v1057 = vld [vmem:[%s7 + $0x4] sm:$0xf]
        %v1058 = vld [vmem:[%s7 + $0x8] sm:$0xf]
        %v1059 = vld [vmem:[%s7 + $0xc] sm:$0xf]
        %v1060 = vld [vmem:[%s7 + $0x10] sm:$0xf]
        %v1061 = vld [vmem:[%s7 + $0x14] sm:$0xf]
        %v1062 = vld [vmem:[%s7 + $0x18] sm:$0xf]
        %v1063 = vld [vmem:[%s7 + $0x1c] sm:$0xf]
        %v1064 = vpack.c.bf16 %v1026, %v1024
        %v1065 = vpack.c.bf16 %v1027, %v1025
        %v1066 = vpack.c.bf16 %v1030, %v1028
        %v1067 = vpack.c.bf16 %v1031, %v1029
        %v1068 = vpack.c.bf16 %v1034, %v1032
        %v1069 = vpack.c.bf16 %v1035, %v1033
        %v1070 = vpack.c.bf16 %v1038, %v1036
        %v1071 = vpack.c.bf16 %v1039, %v1037
        %v1072 = vpack.c.bf16 %v1042, %v1040
        %v1073 = vpack.c.bf16 %v1043, %v1041
        %v1074 = vpack.c.bf16 %v1046, %v1044
        %v1075 = vpack.c.bf16 %v1047, %v1045
        %v1076 = vpack.c.bf16 %v1050, %v1048
        %v1077 = vpack.c.bf16 %v1051, %v1049
        %v1078 = vpack.c.bf16 %v1054, %v1052
        %v1079 = vpack.c.bf16 %v1055, %v1053
        %v1080 = vld [vmem:[%s8] sm:$0xff]
        %v1081 = vld [vmem:[%s8 + $0x8] sm:$0xff]
        %v1082 = vld [vmem:[%s8 + $0x10] sm:$0xff]
        %v1083 = vld [vmem:[%s8 + $0x18] sm:$0xff]
        %v1084 = vld [vmem:[%s8 + $0x20] sm:$0xff]
        %v1085 = vld [vmem:[%s8 + $0x28] sm:$0xff]
        %v1086 = vld [vmem:[%s8 + $0x30] sm:$0xff]
        %v1087 = vld [vmem:[%s8 + $0x38] sm:$0xff]
        %1089 = vset.pattern.permute.xlu0 0
        %1090 = vperm.xlu0 %1089, %v1080
        %v1091 = vpop.permute.xlu0 %1090
        %1094 = vset.pattern.permute.xlu0 0
        %1095 = vperm.xlu0 %1094, %v1081
        %v1096 = vpop.permute.xlu0 %1095
        %1099 = vset.pattern.permute.xlu0 0
        %1100 = vperm.xlu0 %1099, %v1082
        %v1101 = vpop.permute.xlu0 %1100
        %1104 = vset.pattern.permute.xlu0 0
        %1105 = vperm.xlu0 %1104, %v1083
        %v1106 = vpop.permute.xlu0 %1105
        %1109 = vset.pattern.permute.xlu0 0
        %1110 = vperm.xlu0 %1109, %v1084
        %v1111 = vpop.permute.xlu0 %1110
        %1114 = vset.pattern.permute.xlu0 0
        %1115 = vperm.xlu0 %1114, %v1085
        %v1116 = vpop.permute.xlu0 %1115
        %1119 = vset.pattern.permute.xlu0 0
        %1120 = vperm.xlu0 %1119, %v1086
        %v1121 = vpop.permute.xlu0 %1120
        %1124 = vset.pattern.permute.xlu0 0
        %1125 = vperm.xlu0 %1124, %v1087
        %v1126 = vpop.permute.xlu0 %1125
        %v1136 = vunpack.c.l.b16 %v1056
        %v1137 = vunpack.c.l.b16 %v1057
        %v1138 = vunpack.c.l.b16 %v1058
        %v1139 = vunpack.c.l.b16 %v1059
        %v1140 = vunpack.c.l.b16 %v1060
        %v1141 = vunpack.c.l.b16 %v1061
        %v1142 = vunpack.c.l.b16 %v1062
        %v1143 = vunpack.c.l.b16 %v1063
        %v1144 = vpack.c.b16 %v1137, %v1136
        %v1145 = vpack.c.b16 %v1139, %v1138
        %v1146 = vpack.c.b16 %v1141, %v1140
        %v1147 = vpack.c.b16 %v1143, %v1142
        %1152 = vmatpush.bf16.msra.mxu0 %v1078
        %1153 = vmatpush.bf16.msra.mxu0 %v1076
        %1154 = vmatpush.bf16.msra.mxu0 %v1074
        %1155 = vmatpush.bf16.msra.mxu0 %v1072
        %1156 = vmatpush.bf16.msra.mxu0 %v1070
        %1157 = vmatpush.bf16.msra.mxu0 %v1068
        %1158 = vmatpush.bf16.msra.mxu0 %v1066
        %1159 = vmatpush.bf16.msra.mxu0 %v1064
        %1160 = vmatmul.bf16.gmra.mxu0 %v1144
        %v1161 = vpop.f32.mrf.mxu0
        %v1162 = vadd.f32 %v1091, %v1161
        %v1163 = vpop.f32.mrf.mxu0
        %v1164 = vadd.f32 %v1096, %v1163
        %1165 = vmatmul.bf16.gmra.mxu0 %v1145
        %v1166 = vpop.f32.mrf.mxu0
        %v1167 = vadd.f32 %v1101, %v1166
        %v1168 = vpop.f32.mrf.mxu0
        %v1169 = vadd.f32 %v1106, %v1168
        %1170 = vmatmul.bf16.gmra.mxu0 %v1146
        %v1171 = vpop.f32.mrf.mxu0
        %v1172 = vadd.f32 %v1111, %v1171
        %v1173 = vpop.f32.mrf.mxu0
        %v1174 = vadd.f32 %v1116, %v1173
        %1175 = vmatmul.bf16.gmra.mxu0 %v1147
        %v1176 = vpop.f32.mrf.mxu0
        %v1177 = vadd.f32 %v1121, %v1176
        %v1178 = vpop.f32.mrf.mxu0
        %v1179 = vadd.f32 %v1126, %v1178
        %1180 = vdwg.mxu0
        %1181 = vmatpush.bf16.msra.mxu0 %v1079
        %1182 = vmatpush.bf16.msra.mxu0 %v1077
        %1183 = vmatpush.bf16.msra.mxu0 %v1075
        %1184 = vmatpush.bf16.msra.mxu0 %v1073
        %1185 = vmatpush.bf16.msra.mxu0 %v1071
        %1186 = vmatpush.bf16.msra.mxu0 %v1069
        %1187 = vmatpush.bf16.msra.mxu0 %v1067
        %1188 = vmatpush.bf16.msra.mxu0 %v1065
        %1189 = vmatmul.bf16.gmra.mxu0 %v1144
        %v1190 = vpop.f32.mrf.mxu0
        %v1191 = vadd.f32 %v1091, %v1190
        %v1192 = vpop.f32.mrf.mxu0
        %v1193 = vadd.f32 %v1096, %v1192
        %1194 = vmatmul.bf16.gmra.mxu0 %v1145
        %v1195 = vpop.f32.mrf.mxu0
        %v1196 = vadd.f32 %v1101, %v1195
        %v1197 = vpop.f32.mrf.mxu0
        %v1198 = vadd.f32 %v1106, %v1197
        %1199 = vmatmul.bf16.gmra.mxu0 %v1146
        %v1200 = vpop.f32.mrf.mxu0
        %v1201 = vadd.f32 %v1111, %v1200
        %v1202 = vpop.f32.mrf.mxu0
        %v1203 = vadd.f32 %v1116, %v1202
        %1204 = vmatmul.bf16.gmra.mxu0 %v1147
        %v1205 = vpop.f32.mrf.mxu0
        %v1206 = vadd.f32 %v1121, %v1205
        %v1207 = vpop.f32.mrf.mxu0
        %v1208 = vadd.f32 %v1126, %v1207
        %1209 = vdwg.mxu0
        %v1210 = vmax.f32 %v1162, 0.0
        %v1211 = vmax.f32 %v1191, 0.0
        %v1212 = vmax.f32 %v1164, 0.0
        %v1213 = vmax.f32 %v1193, 0.0
        %v1214 = vmax.f32 %v1167, 0.0
        %v1215 = vmax.f32 %v1196, 0.0
        %v1216 = vmax.f32 %v1169, 0.0
        %v1217 = vmax.f32 %v1198, 0.0
        %v1218 = vmax.f32 %v1172, 0.0
        %v1219 = vmax.f32 %v1201, 0.0
        %v1220 = vmax.f32 %v1174, 0.0
        %v1221 = vmax.f32 %v1203, 0.0
        %v1222 = vmax.f32 %v1177, 0.0
        %v1223 = vmax.f32 %v1206, 0.0
        %v1224 = vmax.f32 %v1179, 0.0
        %v1225 = vmax.f32 %v1208, 0.0
        %v1226 = vld [vmem:[%s9] sm:$0xf]
        %v1227 = vld [vmem:[%s9 + $0x4] sm:$0xf]
        %v1228 = vld [vmem:[%s9 + $0x8] sm:$0xf]
        %v1229 = vld [vmem:[%s9 + $0xc] sm:$0xf]
        %v1230 = vpack.c.bf16 %v1212, %v1210
        %v1231 = vpack.c.bf16 %v1213, %v1211
        %v1232 = vpack.c.bf16 %v1216, %v1214
        %v1233 = vpack.c.bf16 %v1217, %v1215
        %v1234 = vpack.c.bf16 %v1220, %v1218
        %v1235 = vpack.c.bf16 %v1221, %v1219
        %v1236 = vpack.c.bf16 %v1224, %v1222
        %v1237 = vpack.c.bf16 %v1225, %v1223
        %v1238 = vld [vmem:[%s10] sm:$0xff]
        %v1239 = vld [vmem:[%s10 + $0x8] sm:$0xff]
        %v1240 = vld [vmem:[%s10 + $0x10] sm:$0xff]
        %v1241 = vld [vmem:[%s10 + $0x18] sm:$0xff]
        %1243 = vset.pattern.permute.xlu0 0
        %1244 = vperm.xlu0 %1243, %v1238
        %v1245 = vpop.permute.xlu0 %1244
        %1248 = vset.pattern.permute.xlu0 0
        %1249 = vperm.xlu0 %1248, %v1239
        %v1250 = vpop.permute.xlu0 %1249
        %1253 = vset.pattern.permute.xlu0 0
        %1254 = vperm.xlu0 %1253, %v1240
        %v1255 = vpop.permute.xlu0 %1254
        %1258 = vset.pattern.permute.xlu0 0
        %1259 = vperm.xlu0 %1258, %v1241
        %v1260 = vpop.permute.xlu0 %1259
        %v1266 = vunpack.c.l.b16 %v1226
        %v1267 = vunpack.c.l.b16 %v1227
        %v1268 = vunpack.c.l.b16 %v1228
        %v1269 = vunpack.c.l.b16 %v1229
        %v1270 = vpack.c.b16 %v1267, %v1266
        %v1271 = vpack.c.b16 %v1269, %v1268
        %v1273 = vsel %vm901, %v1270, 0
        %v1276 = vsel %vm901, %v1271, 0
        %1278 = vmatpush.bf16.msra.mxu0 0
        %1279 = vmatpush.bf16.msra.mxu0 0
        %1280 = vmatpush.bf16.msra.mxu0 0
        %1281 = vmatpush.bf16.msra.mxu0 0
        %1282 = vmatpush.bf16.msra.mxu0 %v1236
        %1283 = vmatpush.bf16.msra.mxu0 %v1234
        %1284 = vmatpush.bf16.msra.mxu0 %v1232
        %1285 = vmatpush.bf16.msra.mxu0 %v1230
        %1286 = vmatmul.bf16.gmra.mxu0 %v1273
        %v1287 = vpop.f32.mrf.mxu0
        %v1288 = vadd.f32 %v1245, %v1287
        %v1289 = vpop.f32.mrf.mxu0
        %v1290 = vadd.f32 %v1250, %v1289
        %1291 = vmatmul.bf16.gmra.mxu0 %v1276
        %v1292 = vpop.f32.mrf.mxu0
        %v1293 = vadd.f32 %v1255, %v1292
        %v1294 = vpop.f32.mrf.mxu0
        %v1295 = vadd.f32 %v1260, %v1294
        %1296 = vdwg.mxu0
        %1297 = vmatpush.bf16.msra.mxu0 0
        %1298 = vmatpush.bf16.msra.mxu0 0
        %1299 = vmatpush.bf16.msra.mxu0 0
        %1300 = vmatpush.bf16.msra.mxu0 0
        %1301 = vmatpush.bf16.msra.mxu0 %v1237
        %1302 = vmatpush.bf16.msra.mxu0 %v1235
        %1303 = vmatpush.bf16.msra.mxu0 %v1233
        %1304 = vmatpush.bf16.msra.mxu0 %v1231
        %1305 = vmatmul.bf16.gmra.mxu0 %v1273
        %v1306 = vpop.f32.mrf.mxu0
        %v1307 = vadd.f32 %v1245, %v1306
        %v1308 = vpop.f32.mrf.mxu0
        %v1309 = vadd.f32 %v1250, %v1308
        %1310 = vmatmul.bf16.gmra.mxu0 %v1276
        %v1311 = vpop.f32.mrf.mxu0
        %v1312 = vadd.f32 %v1255, %v1311
        %v1313 = vpop.f32.mrf.mxu0
        %v1314 = vadd.f32 %v1260, %v1313
        %1315 = vdwg.mxu0
        %v1316 = vmax.f32 %v1288, 0.0
        %v1317 = vmax.f32 %v1307, 0.0
        %v1318 = vmax.f32 %v1290, 0.0
        %v1319 = vmax.f32 %v1309, 0.0
        %v1320 = vmax.f32 %v1293, 0.0
        %v1321 = vmax.f32 %v1312, 0.0
        %v1322 = vmax.f32 %v1295, 0.0
        %v1323 = vmax.f32 %v1314, 0.0
        %v1324 = vld [vmem:[%s11] sm:$0x1]
        %v1325 = vpack.c.bf16 %v1318, %v1316
        %v1326 = vpack.c.bf16 %v1319, %v1317
        %v1327 = vpack.c.bf16 %v1322, %v1320
        %v1328 = vpack.c.bf16 %v1323, %v1321
        %v1329 = vld [vmem:[#allocation2] sm:$0x1]
        %1331 = vset.pattern.permute.xlu0 0
        %1332 = vperm.xlu0 %1331, %v1329
        %v1333 = vpop.permute.xlu0 %1332
        %v1335 = vperm.slane %v1333, 0
        %v1337 = vsel %vm654, %v1324, 0
        %1339 = vmatpush.bf16.msra.mxu0 0
        %1340 = vmatpush.bf16.msra.mxu0 0
        %1341 = vmatpush.bf16.msra.mxu0 0
        %1342 = vmatpush.bf16.msra.mxu0 0
        %1343 = vmatpush.bf16.msra.mxu0 0
        %1344 = vmatpush.bf16.msra.mxu0 0
        %1345 = vmatpush.bf16.msra.mxu0 %v1327
        %1346 = vmatpush.bf16.msra.mxu0 %v1325
        %1347 = vmatmul.bf16.gmra.mxu0 %v1337
        %v1348 = vpop.f32.mrf.mxu0
        %v1349 = vadd.f32 %v1335, %v1348
        %v1350 = vpop.f32.mrf.mxu0
        %1351 = vdwg.mxu0
        %1352 = vmatpush.bf16.msra.mxu0 0
        %1353 = vmatpush.bf16.msra.mxu0 0
        %1354 = vmatpush.bf16.msra.mxu0 0
        %1355 = vmatpush.bf16.msra.mxu0 0
        %1356 = vmatpush.bf16.msra.mxu0 0
        %1357 = vmatpush.bf16.msra.mxu0 0
        %1358 = vmatpush.bf16.msra.mxu0 %v1328
        %1359 = vmatpush.bf16.msra.mxu0 %v1326
        %1360 = vmatmul.bf16.gmra.mxu0 %v1337
        %v1361 = vpop.f32.mrf.mxu0
        %v1362 = vadd.f32 %v1335, %v1361
        %v1363 = vpop.f32.mrf.mxu0
        %1364 = vdwg.mxu0
        %v1367 = vrot.slane %v1362, 7
        %vm1368 = vcmask 1040384
        %v1369 = vsel %vm1368, %v1349, %v1367
        %v1371 = vlaneseq
        %vm1372 = vcmp.ge.s32.totalorder %v1371, 0
        %vm1373 = vcmp.lt.s32.totalorder %v1371, 256
        %vm1374 = vmand %vm1372, %vm1373
        %1375 = vst.msk [vmem:[%s467] sm:$0x3] %vm1374, %v1369
        %s1376 = smul.u32 2, %s26
        %p1377 = scmp.lt.s32.totalorder %s1376, 7
        %s1378 = scalar_select %p1377, %s1376, 7
        %s1379 = scalar_lea.vmem %s13, %s1378
        // Predicated region
        $region96: #{mlp_forward.1} parent=90 // pred_check
          %p1380 = pneg %p322
        $region97: #{mlp_forward.1} parent=90 // pred_check_branch
          %1382 = sbr.rel (%p1380) target = $region99
        $region98: #{mlp_forward.1} parent=90 // pred_region
          %s1383 = smul.u32 2, %s26
        $region99: #{mlp_forward.1} parent=90 // pred_fallthru
          _
      $region91: #{mlp_forward.1} parent=5 // pred_fallthru
        _
      %p1384 = scmp.le.s32.totalorder 2, %s21
      // Predicated region
      $region100: #{mlp_forward.1} parent=5 // pred_check
        %p1385 = pneg %p1384
      $region101: #{mlp_forward.1} parent=5 // pred_check_branch
        %1387 = sbr.rel (%p1385) target = $region103
      $region102: #{mlp_forward.1} parent=5 // pred_region
        %s1388 = ssub.s32 %s21, 2
        // Predicated region
        $region104: #{mlp_forward.1} parent=102 // pred_check
          %p1389 = pneg %p328
        $region105: #{mlp_forward.1} parent=102 // pred_check_branch
          %1391 = sbr.rel (%p1389) target = $region107
        $region106: #{mlp_forward.1} parent=102 // pred_region
          %s1392 = smul.u32 2, %s27
          %p1393 = scmp.lt.s32.totalorder %s1392, 7
          %s1394 = scalar_select %p1393, %s1392, 7
          %s1395 = scalar_lea.vmem %s13, %s1394
        $region107: #{mlp_forward.1} parent=102 // pred_fallthru
          _
      $region103: #{mlp_forward.1} parent=5 // pred_fallthru
        _
    $region6: #{mlp_forward.1} parent=1 // loop_footer
      %s25 = sadd.s32 1, %s21
    $region7: #{mlp_forward.1} parent=1 // loop_footer_branch
      %20 = sbr.rel target = $region3
    $region8: #{mlp_forward.1} parent=1 // loop_exit
      _

</llo_original>
